<compile_context>
chip_gen: v7x
topology: tpu7x:2x2x1
jax: 0.10.0
libtpu: 0.0.40
codegen_flags: <defaults>
</compile_context>

<pallas_src>
import jax
import jax.numpy as jnp
from jax.experimental import pallas as pl
from jax.experimental.pallas import tpu as pltpu


# ---------------------------------------------------------------------------
# Kernel 1: fused supports(row tile) + graph conv in wide layout
#   out[i*TM:(i+1)*TM, :] = softmax(relu(E_tile @ E^T)) @ X  + X_tile + bias
#   (the "+ X_tile" term implements the I_N in supports = I + softmax(...))
# ---------------------------------------------------------------------------
def fused_supports_gconv_kernel(emb_tile_ref, emb_full_ref, x_full_ref,
                                x_tile_ref, bias_ref, o_ref):
    e_t = emb_tile_ref[...].astype(jnp.float32)                 # (TM, De)
    e_f = emb_full_ref[...].astype(jnp.float32)                 # (N,  De)
    # E_tile @ E^T without an explicit transpose: contract last axes of both.
    s = jax.lax.dot_general(
        e_t, e_f,
        dimension_numbers=(((1,), (1,)), ((), ())),
        preferred_element_type=jnp.float32)                     # (TM, N)
    s = jnp.maximum(s, 0.0)                                     # relu
    # row softmax (dim=1); full row is resident in lanes -> single reduction
    s_max = jnp.max(s, axis=1, keepdims=True)
    p = jnp.exp(s - s_max)
    soft = p * pl.reciprocal(jnp.sum(p, axis=1, keepdims=True), approx=False)
    # one wide MXU matmul: (TM, N) @ (N, B*C)
    xg = jnp.dot(soft, x_full_ref[...].astype(jnp.float32),
                 preferred_element_type=jnp.float32)            # (TM, B*C)
    xg = xg + x_tile_ref[...].astype(jnp.float32)               # identity term
    o_ref[...] = (xg + bias_ref[...]).astype(o_ref.dtype)


# ---------------------------------------------------------------------------
# Kernel 2: plain linear on a flattened (rows, C_in) slab:  out = x @ W + bias
# ---------------------------------------------------------------------------
def linear_kernel(x_ref, w_ref, b_ref, o_ref):
    out = jnp.dot(x_ref[...].astype(jnp.float32),
                  w_ref[...].astype(jnp.float32),
                  preferred_element_type=jnp.float32)           # (TR, C_out)
    o_ref[...] = (out + b_ref[...]).astype(o_ref.dtype)


# ---------------------------------------------------------------------------
# Helpers
# ---------------------------------------------------------------------------
def _pick_tile(n, candidates=(512, 256, 128, 64, 32, 16, 8)):
    for c in candidates:
        if c <= n and n % c == 0:
            return c
    return n  # fall back to the full extent (block == full dim is always legal)


def _fused_vmem_limit(n, de, bc, tm):
    f32 = 4
    pad = lambda v, m: ((v + m - 1) // m) * m
    est = f32 * (
        2 * pad(tm, 8) * pad(de, 128)      # emb row tile (double-buffered)
        + 2 * pad(n, 8) * pad(de, 128)     # resident full embedding
        + 2 * pad(n, 8) * pad(bc, 128)     # resident x slab
        + 4 * pad(tm, 8) * pad(bc, 128)    # x residual tile + output tile
        + 2 * 8 * pad(bc, 128)             # bias row
        + 3 * pad(tm, 8) * pad(n, 128)     # in-kernel supports row temporaries
    )
    # never below the default scoped limit; cap at v7x physical VMEM (64 MiB)
    return int(min(max(2 * est, 32 * 1024 * 1024), 64 * 1024 * 1024))


def _fused_supports_gconv(emb, x_wide, bias_wide):
    """x_wide: (N, B*C) lane-dense slab. Returns (N, B*C)."""
    N, De = emb.shape
    BC = x_wide.shape[1]
    tm = _pick_tile(N)
    return pl.pallas_call(
        fused_supports_gconv_kernel,
        grid=(N // tm,),
        in_specs=[
            pl.BlockSpec((tm, De), lambda i: (i, 0)),   # emb row tile (LHS)
            pl.BlockSpec((N, De), lambda i: (0, 0)),    # full emb (resident)
            pl.BlockSpec((N, BC), lambda i: (0, 0)),    # full x slab (resident)
            pl.BlockSpec((tm, BC), lambda i: (i, 0)),   # x row tile (residual)
            pl.BlockSpec((1, BC), lambda i: (0, 0)),    # bias row (or zeros)
        ],
        out_specs=pl.BlockSpec((tm, BC), lambda i: (i, 0)),
        out_shape=jax.ShapeDtypeStruct((N, BC), jnp.float32),
        compiler_params=pltpu.CompilerParams(
            dimension_semantics=("parallel",),
            vmem_limit_bytes=_fused_vmem_limit(N, De, BC, tm)),
    )(emb, emb, x_wide, x_wide, bias_wide)


def _linear(x2d, w, bias_row):
    """x2d: (M, C_in). Returns x2d @ w + bias_row, shape (M, C_out)."""
    M, C_in = x2d.shape
    C_out = w.shape[1]
    tr = _pick_tile(M)
    return pl.pallas_call(
        linear_kernel,
        grid=(M // tr,),
        in_specs=[
            pl.BlockSpec((tr, C_in), lambda i: (i, 0)),
            pl.BlockSpec((C_in, C_out), lambda i: (0, 0)),
            pl.BlockSpec((1, C_out), lambda i: (0, 0)),
        ],
        out_specs=pl.BlockSpec((tr, C_out), lambda i: (i, 0)),
        out_shape=jax.ShapeDtypeStruct((M, C_out), jnp.float32),
        compiler_params=pltpu.CompilerParams(
            dimension_semantics=("parallel",)),
    )(x2d, w, bias_row)


# ---------------------------------------------------------------------------
# Wrapper
# ---------------------------------------------------------------------------
def emb_gcn_linear(x, node_embeddings, w, bias):
    """x: (B, N, C_in), node_embeddings: (N, De), w: (C_in, C_out), bias: (C_out,)"""
    B, N, C_in = x.shape
    C_out = w.shape[1]

    if C_in <= C_out:
        # graph conv first: the (N,N) contraction sees the narrower C_in.
        x_wide = jnp.transpose(x, (1, 0, 2)).reshape(N, B * C_in)
        zero_bias = jnp.zeros((1, B * C_in), jnp.float32)
        xg_wide = _fused_supports_gconv(node_embeddings, x_wide, zero_bias)
        xg = jnp.transpose(xg_wide.reshape(N, B, C_in),
                           (1, 0, 2)).reshape(B * N, C_in)
        out = _linear(xg, w, bias.reshape(1, C_out))
        return out.reshape(B, N, C_out)
    else:
        # linear first: the (N,N) contraction sees the narrower C_out.
        xw = _linear(x.reshape(B * N, C_in), w,
                     jnp.zeros((1, C_out), jnp.float32))
        xw_wide = jnp.transpose(xw.reshape(B, N, C_out),
                                (1, 0, 2)).reshape(N, B * C_out)
        bias_wide = jnp.tile(bias, B).reshape(1, B * C_out)
        out_wide = _fused_supports_gconv(node_embeddings, xw_wide, bias_wide)
        return jnp.transpose(out_wide.reshape(N, B, C_out), (1, 0, 2))


# Pure-JAX reference for correctness check.
def emb_gcn_linear_ref(x, node_embeddings, w, bias):
    N = node_embeddings.shape[0]
    s = jnp.maximum(node_embeddings @ node_embeddings.T, 0.0)
    supports = jnp.eye(N, dtype=jnp.float32) + jax.nn.softmax(s, axis=1)
    x_g = jnp.einsum('nm,bmc->bnc', supports, x)
    return x_g @ w + bias


if __name__ == "__main__":
    key = jax.random.PRNGKey(0)
    # (B, N, C_in, C_out, embed_dim); exercises both matmul orderings.
    configs = [
        (2, 16, 4, 8, 8),   # C_in < C_out -> gcn-first path
        (2, 16, 8, 4, 8),   # C_out < C_in -> linear-first path
    ]
    for (B, N, C_in, C_out, De) in configs:
        kx, ke, kw, kb, key = jax.random.split(key, 5)
        x = jax.random.normal(kx, (B, N, C_in), dtype=jnp.float32)
        node_embeddings = jax.random.normal(ke, (N, De), dtype=jnp.float32)
        # nn.Linear(dim_in, dim_out) params, stored pre-transposed as (C_in, C_out)
        w = jax.random.normal(kw, (C_in, C_out), dtype=jnp.float32) * 0.1
        bias = jax.random.normal(kb, (C_out,), dtype=jnp.float32) * 0.1

        out = jax.block_until_ready(emb_gcn_linear(x, node_embeddings, w, bias))
        ref = emb_gcn_linear_ref(x, node_embeddings, w, bias)
        assert out.shape == (B, N, C_out)
        assert jnp.allclose(out, ref, atol=1e-4, rtol=1e-4), "mismatch vs reference"

    print("KERNEL_OK")
</pallas_src>

<mosaic_0001>
module attributes {stable_mosaic.version = 11 : i64} {
  func.func @fused_supports_gconv_kernel(%arg0: i32, %arg1: memref<16x8xf32, #tpu.memory_space<vmem>>, %arg2: memref<16x8xf32, #tpu.memory_space<vmem>>, %arg3: memref<16x8xf32, #tpu.memory_space<vmem>>, %arg4: memref<16x8xf32, #tpu.memory_space<vmem>>, %arg5: memref<1x8xf32, #tpu.memory_space<vmem>>, %arg6: memref<16x8xf32, #tpu.memory_space<vmem>>) attributes {dimension_semantics = [#tpu.dimension_semantics<parallel>], iteration_bounds = array<i64: 1>, scalar_prefetch = 0 : i64, scratch_operands = 0 : i64, tpu.core_type = #tpu.core_type<tc>, window_params = [{transform_indices = @transform_0, window_bounds = array<i64: 16, 8>}, {pipeline_mode = #tpu.pipeline_mode<synchronous>, transform_indices = @transform_1, window_bounds = array<i64: 16, 8>}, {pipeline_mode = #tpu.pipeline_mode<synchronous>, transform_indices = @transform_2, window_bounds = array<i64: 16, 8>}, {transform_indices = @transform_3, window_bounds = array<i64: 16, 8>}, {pipeline_mode = #tpu.pipeline_mode<synchronous>, transform_indices = @transform_4, window_bounds = array<i64: 1, 8>}, {transform_indices = @transform_5, window_bounds = array<i64: 16, 8>}]} {
    %c0 = arith.constant 0 : index
    %c0_0 = arith.constant 0 : index
    %0 = vector.load %arg1[%c0, %c0_0] : memref<16x8xf32, #tpu.memory_space<vmem>>, vector<16x8xf32>
    %c0_1 = arith.constant 0 : index
    %c0_2 = arith.constant 0 : index
    %1 = vector.load %arg2[%c0_1, %c0_2] : memref<16x8xf32, #tpu.memory_space<vmem>>, vector<16x8xf32>
    %cst = arith.constant dense<0.000000e+00> : vector<16x16xf32>
    %2 = tpu.matmul %0, %1, %cst {dimension_numbers = #tpu.dot_dimension_numbers<[1], [1], [0], [0], [0, 0, 1, 0], [], []>} : vector<16x8xf32>, vector<16x8xf32>, vector<16x16xf32> -> vector<16x16xf32>
    %cst_3 = arith.constant 0.000000e+00 : f32
    %3 = vector.broadcast %cst_3 : f32 to vector<16x16xf32>
    %4 = arith.maximumf %2, %3 : vector<16x16xf32>
    %cst_4 = arith.constant dense<0xFF800000> : vector<16xf32>
    %5 = vector.multi_reduction <maximumf>, %4, %cst_4 [1] : vector<16x16xf32> to vector<16xf32>
    %6 = vector.shape_cast %5 : vector<16xf32> to vector<16x1xf32>
    %7 = vector.broadcast %6 : vector<16x1xf32> to vector<16x16xf32>
    %8 = arith.subf %4, %7 : vector<16x16xf32>
    %9 = math.exp %8 : vector<16x16xf32>
    %cst_5 = arith.constant dense<0.000000e+00> : vector<16xf32>
    %10 = vector.multi_reduction <add>, %9, %cst_5 [1] : vector<16x16xf32> to vector<16xf32>
    %11 = vector.shape_cast %10 : vector<16xf32> to vector<16x1xf32>
    %12 = tpu.reciprocal %11 : vector<16x1xf32> -> vector<16x1xf32>
    %13 = vector.broadcast %12 : vector<16x1xf32> to vector<16x16xf32>
    %14 = arith.mulf %9, %13 : vector<16x16xf32>
    %c0_6 = arith.constant 0 : index
    %c0_7 = arith.constant 0 : index
    %15 = vector.load %arg3[%c0_6, %c0_7] : memref<16x8xf32, #tpu.memory_space<vmem>>, vector<16x8xf32>
    %cst_8 = arith.constant dense<0.000000e+00> : vector<16x8xf32>
    %16 = tpu.matmul %14, %15, %cst_8 {dimension_numbers = #tpu.dot_dimension_numbers<[1], [0], [0], [1], [0, 0, 1, 1], [], []>} : vector<16x16xf32>, vector<16x8xf32>, vector<16x8xf32> -> vector<16x8xf32>
    %c0_9 = arith.constant 0 : index
    %c0_10 = arith.constant 0 : index
    %17 = vector.load %arg4[%c0_9, %c0_10] : memref<16x8xf32, #tpu.memory_space<vmem>>, vector<16x8xf32>
    %18 = arith.addf %16, %17 : vector<16x8xf32>
    %c0_11 = arith.constant 0 : index
    %c0_12 = arith.constant 0 : index
    %19 = vector.load %arg5[%c0_11, %c0_12] : memref<1x8xf32, #tpu.memory_space<vmem>>, vector<1x8xf32>
    %20 = vector.broadcast %19 : vector<1x8xf32> to vector<16x8xf32>
    %21 = arith.addf %18, %20 : vector<16x8xf32>
    %c0_13 = arith.constant 0 : index
    %c0_14 = arith.constant 0 : index
    %22 = vector.load %arg6[%c0_13, %c0_14] : memref<16x8xf32, #tpu.memory_space<vmem>>, vector<16x8xf32>
    tpu.vector_store %arg6[%c0_13, %c0_14], %21 {strides = array<i32>} : memref<16x8xf32, #tpu.memory_space<vmem>>, vector<16x8xf32>,
    return
  }
  func.func @transform_0(%arg0: i32) -> (i32, i32) {
    %c0_i32 = arith.constant 0 : i32
    %c0_i32_0 = arith.constant 0 : i32
    return %arg0, %c0_i32 : i32, i32
  }
  func.func @transform_1(%arg0: i32) -> (i32, i32) {
    %c0_i32 = arith.constant 0 : i32
    %c0_i32_0 = arith.constant 0 : i32
    %c0_i32_1 = arith.constant 0 : i32
    return %c0_i32, %c0_i32_0 : i32, i32
  }
  func.func @transform_2(%arg0: i32) -> (i32, i32) {
    %c0_i32 = arith.constant 0 : i32
    %c0_i32_0 = arith.constant 0 : i32
    %c0_i32_1 = arith.constant 0 : i32
    return %c0_i32, %c0_i32_0 : i32, i32
  }
  func.func @transform_3(%arg0: i32) -> (i32, i32) {
    %c0_i32 = arith.constant 0 : i32
    %c0_i32_0 = arith.constant 0 : i32
    return %arg0, %c0_i32 : i32, i32
  }
  func.func @transform_4(%arg0: i32) -> (i32, i32) {
    %c0_i32 = arith.constant 0 : i32
    %c0_i32_0 = arith.constant 0 : i32
    %c0_i32_1 = arith.constant 0 : i32
    return %c0_i32, %c0_i32_0 : i32, i32
  }
  func.func @transform_5(%arg0: i32) -> (i32, i32) {
    %c0_i32 = arith.constant 0 : i32
    %c0_i32_0 = arith.constant 0 : i32
    return %arg0, %c0_i32 : i32, i32
  }
}

</mosaic_0001>

<llo_original>
// kernel: tpu_custom_call.1
$region0: #{tpu_custom_call.1}
  #allocation0 [shape = 'u32[]', space=smem, size = 0x4, offset = 0x4, fixed_abs, tag = 'smem constant byte address 0x4 - core index']
  #allocation1 [shape = 'u32[144,128]{1,0:T(1,128)}', space=vmem, size = 0x12000, scoped, tag = 'internal scratch']
  %s0 = inlined_call_operand.vmem [shape: f32[16,8], index: 0, kind: input, shape index: {}]
  %s1 = inlined_call_operand.vmem [shape: f32[16,8], index: 1, kind: input, shape index: {}]
  %s2 = inlined_call_operand.vmem [shape: f32[16,8], index: 2, kind: input, shape index: {}]
  %s3 = inlined_call_operand.vmem [shape: f32[16,8], index: 3, kind: input, shape index: {}]
  %s4 = inlined_call_operand.vmem [shape: f32[1,8], index: 4, kind: input, shape index: {}]
  %s5 = inlined_call_operand.vmem [shape: f32[16,8], index: 5, kind: output, shape index: {}]
  %s6 = sld [smem:[#allocation0]]
  $region30: #{tpu_custom_call.1} parent=0
    _
  %s8 = ssub.s32 1, %s6
  %s9 = scalar_select 0, %s8, %s6
  // Predicated region
  $region2: #{tpu_custom_call.1} parent=0 // pred_check
    _
  $region3: #{tpu_custom_call.1} parent=0 // pred_check_branch
    %11 = sbr.rel (0) target = $region5
  $region4: #{tpu_custom_call.1} parent=0 // pred_region
    _
  $region5: #{tpu_custom_call.1} parent=0 // pred_fallthru
    _
  // Predicated region
  $region6: #{tpu_custom_call.1} parent=0 // pred_check
    _
  $region7: #{tpu_custom_call.1} parent=0 // pred_check_branch
    %13 = sbr.rel (0) target = $region9
  $region8: #{tpu_custom_call.1} parent=0 // pred_region
    _
  $region9: #{tpu_custom_call.1} parent=0 // pred_fallthru
    _
  // Predicated region
  $region10: #{tpu_custom_call.1} parent=0 // pred_check
    _
  $region11: #{tpu_custom_call.1} parent=0 // pred_check_branch
    %15 = sbr.rel (0) target = $region13
  $region12: #{tpu_custom_call.1} parent=0 // pred_region
    _
  $region13: #{tpu_custom_call.1} parent=0 // pred_fallthru
    _
  // Predicated region
  $region14: #{tpu_custom_call.1} parent=0 // pred_check
    _
  $region15: #{tpu_custom_call.1} parent=0 // pred_check_branch
    %17 = sbr.rel (0) target = $region17
  $region16: #{tpu_custom_call.1} parent=0 // pred_region
    _
  $region17: #{tpu_custom_call.1} parent=0 // pred_fallthru
    _
  // Predicated region
  $region18: #{tpu_custom_call.1} parent=0 // pred_check
    _
  $region19: #{tpu_custom_call.1} parent=0 // pred_check_branch
    %19 = sbr.rel (0) target = $region21
  $region20: #{tpu_custom_call.1} parent=0 // pred_region
    _
  $region21: #{tpu_custom_call.1} parent=0 // pred_fallthru
    _
  %v20 = vld [vmem:[%s0] sm:$0xff]
  %v21 = vld [vmem:[%s0 + $0x8] sm:$0xff]
  %v22 = vld [vmem:[%s1] sm:$0xff]
  %v23 = vld [vmem:[%s1 + $0x8] sm:$0xff]
  %vm24 = vcmask 64512
  %v26 = vsel %vm24, %v20, 0
  %v29 = vsel %vm24, %v21, 0
  %v32 = vsel %vm24, %v22, 0
  %v35 = vsel %vm24, %v23, 0
  %37 = vmatprep.subr.mxu0 0.0
  %38 = vmatpush1.xpose.msra.mxu0 %v32
  %39 = vmatprep.subr.mxu0 0.0
  %40 = vmatpush1.xpose.msra.mxu0 %v35
  %41 = vmatprep.subr.mxu0 0.0
  %42 = vmatpush1.xpose.msra.mxu0 0.0
  %43 = vmatprep.subr.mxu0 0.0
  %44 = vmatpush1.xpose.msra.mxu0 0.0
  %45 = vmatprep.subr.mxu0 0.0
  %46 = vmatpush1.xpose.msra.mxu0 0.0
  %47 = vmatprep.subr.mxu0 0.0
  %48 = vmatpush1.xpose.msra.mxu0 0.0
  %49 = vmatprep.subr.mxu0 0.0
  %50 = vmatpush1.xpose.msra.mxu0 0.0
  %51 = vmatprep.subr.mxu0 0.0
  %52 = vmatpush1.xpose.msra.mxu0 0.0
  %53 = vmatprep.subr.mxu0 0.0
  %54 = vmatpush1.xpose.msra.mxu0 0.0
  %55 = vmatprep.subr.mxu0 0.0
  %56 = vmatpush1.xpose.msra.mxu0 0.0
  %57 = vmatprep.subr.mxu0 0.0
  %58 = vmatpush1.xpose.msra.mxu0 0.0
  %59 = vmatprep.subr.mxu0 0.0
  %60 = vmatpush1.xpose.msra.mxu0 0.0
  %61 = vmatprep.subr.mxu0 0.0
  %62 = vmatpush1.xpose.msra.mxu0 0.0
  %63 = vmatprep.subr.mxu0 0.0
  %64 = vmatpush1.xpose.msra.mxu0 0.0
  %65 = vmatprep.subr.mxu0 0.0
  %66 = vmatpush1.xpose.msra.mxu0 0.0
  %67 = vmatprep.subr.mxu0 0.0
  %68 = vmatpush1.xpose.msra.mxu0 0.0
  %69 = vmatprep.subr.mxu0 0.0
  %70 = vmatpush1.xpose.msra.mxu0 0.0
  %71 = vmatprep.subr.mxu0 0.0
  %72 = vmatpush1.xpose.msra.mxu0 0.0
  %73 = vmatprep.subr.mxu0 0.0
  %74 = vmatpush1.xpose.msra.mxu0 0.0
  %75 = vmatprep.subr.mxu0 0.0
  %76 = vmatpush1.xpose.msra.mxu0 0.0
  %77 = vmatprep.subr.mxu0 0.0
  %78 = vmatpush1.xpose.msra.mxu0 0.0
  %79 = vmatprep.subr.mxu0 0.0
  %80 = vmatpush1.xpose.msra.mxu0 0.0
  %81 = vmatprep.subr.mxu0 0.0
  %82 = vmatpush1.xpose.msra.mxu0 0.0
  %83 = vmatprep.subr.mxu0 0.0
  %84 = vmatpush1.xpose.msra.mxu0 0.0
  %85 = vmatprep.subr.mxu0 0.0
  %86 = vmatpush1.xpose.msra.mxu0 0.0
  %87 = vmatprep.subr.mxu0 0.0
  %88 = vmatpush1.xpose.msra.mxu0 0.0
  %89 = vmatprep.subr.mxu0 0.0
  %90 = vmatpush1.xpose.msra.mxu0 0.0
  %91 = vmatprep.subr.mxu0 0.0
  %92 = vmatpush1.xpose.msra.mxu0 0.0
  %93 = vmatprep.subr.mxu0 0.0
  %94 = vmatpush1.xpose.msra.mxu0 0.0
  %95 = vmatprep.subr.mxu0 0.0
  %96 = vmatpush1.xpose.msra.mxu0 0.0
  %97 = vmatprep.subr.mxu0 0.0
  %98 = vmatpush1.xpose.msra.mxu0 0.0
  %99 = vmatprep.subr.mxu0 0.0
  %100 = vmatpush1.xpose.msra.mxu0 0.0
  %101 = vmatprep.mubr.f32.mxu0 0.0
  %102 = vmatmul.mubr.f32.gmra.mrb[0].mxu0 %v26
  %v103 = vpop.f32.mrb[0].mxu0
  %v104 = vadd.f32 0.0, %v103
  %v105 = vpop.f32.mrb[0].mxu0
  %106 = vmatprep.mubr.f32.mxu0 0.0
  %107 = vmatmul.mubr.f32.gmra.mrb[0].mxu0 %v29
  %v108 = vpop.f32.mrb[0].mxu0
  %v109 = vadd.f32 0.0, %v108
  %v110 = vpop.f32.mrb[0].mxu0
  %111 = vdwg.mxu0
  %v112 = vmax.f32 %v104, 0.0
  %v113 = vmax.f32 %v109, 0.0
  %vm114 = vcmask 130048
  %v115 = vsel %vm114, %v112, -inf
  %116 = vmax.xlane.f32.xlu0 %v115
  %v117 = vpop.xlane.xlu0 %116
  %v118 = vsel %vm114, %v113, -inf
  %119 = vmax.xlane.f32.xlu0 %v118
  %v120 = vpop.xlane.xlu0 %119
  %v121 = vsub.f32 %v112, %v117
  %v122 = vsub.f32 %v113, %v120
  %v123 = vmul.f32 %v121, 1.442695
  %v124 = vpow.pop %v123
  %v125 = vmul.f32 %v122, 1.442695
  %v126 = vpow.pop %v125
  %v127 = vsel %vm114, %v124, 0.0
  %128 = vadd.xlane.f32.xlu0 %v127
  %v129 = vpop.xlane.xlu0 %128
  %v130 = vsel %vm114, %v126, 0.0
  %131 = vadd.xlane.f32.xlu0 %v130
  %v132 = vpop.xlane.xlu0 %131
  %v133 = vrcp.pop %v129
  %v134 = vrcp.pop %v132
  %v135 = vmul.f32 %v124, %v133
  %v136 = vmul.f32 %v126, %v134
  %v137 = vld [vmem:[%s2] sm:$0xff]
  %v138 = vld [vmem:[%s2 + $0x8] sm:$0xff]
  %v139 = vld [vmem:[%s3] sm:$0xff]
  %v140 = vld [vmem:[%s3 + $0x8] sm:$0xff]
  %v142 = vsel %vm114, %v135, 0
  %v145 = vsel %vm114, %v136, 0
  %147 = vmatprep.subr.mxu0 0.0
  %148 = vmatpush1.msra.mxu0 %v137
  %149 = vmatprep.subr.mxu0 0.0
  %150 = vmatpush1.msra.mxu0 %v138
  %151 = vmatprep.subr.mxu0 0.0
  %152 = vmatpush1.msra.mxu0 0.0
  %153 = vmatprep.subr.mxu0 0.0
  %154 = vmatpush1.msra.mxu0 0.0
  %155 = vmatprep.subr.mxu0 0.0
  %156 = vmatpush1.msra.mxu0 0.0
  %157 = vmatprep.subr.mxu0 0.0
  %158 = vmatpush1.msra.mxu0 0.0
  %159 = vmatprep.subr.mxu0 0.0
  %160 = vmatpush1.msra.mxu0 0.0
  %161 = vmatprep.subr.mxu0 0.0
  %162 = vmatpush1.msra.mxu0 0.0
  %163 = vmatprep.subr.mxu0 0.0
  %164 = vmatpush1.msra.mxu0 0.0
  %165 = vmatprep.subr.mxu0 0.0
  %166 = vmatpush1.msra.mxu0 0.0
  %167 = vmatprep.subr.mxu0 0.0
  %168 = vmatpush1.msra.mxu0 0.0
  %169 = vmatprep.subr.mxu0 0.0
  %170 = vmatpush1.msra.mxu0 0.0
  %171 = vmatprep.subr.mxu0 0.0
  %172 = vmatpush1.msra.mxu0 0.0
  %173 = vmatprep.subr.mxu0 0.0
  %174 = vmatpush1.msra.mxu0 0.0
  %175 = vmatprep.subr.mxu0 0.0
  %176 = vmatpush1.msra.mxu0 0.0
  %177 = vmatprep.subr.mxu0 0.0
  %178 = vmatpush1.msra.mxu0 0.0
  %179 = vmatprep.subr.mxu0 0.0
  %180 = vmatpush1.msra.mxu0 0.0
  %181 = vmatprep.subr.mxu0 0.0
  %182 = vmatpush1.msra.mxu0 0.0
  %183 = vmatprep.subr.mxu0 0.0
  %184 = vmatpush1.msra.mxu0 0.0
  %185 = vmatprep.subr.mxu0 0.0
  %186 = vmatpush1.msra.mxu0 0.0
  %187 = vmatprep.subr.mxu0 0.0
  %188 = vmatpush1.msra.mxu0 0.0
  %189 = vmatprep.subr.mxu0 0.0
  %190 = vmatpush1.msra.mxu0 0.0
  %191 = vmatprep.subr.mxu0 0.0
  %192 = vmatpush1.msra.mxu0 0.0
  %193 = vmatprep.subr.mxu0 0.0
  %194 = vmatpush1.msra.mxu0 0.0
  %195 = vmatprep.subr.mxu0 0.0
  %196 = vmatpush1.msra.mxu0 0.0
  %197 = vmatprep.subr.mxu0 0.0
  %198 = vmatpush1.msra.mxu0 0.0
  %199 = vmatprep.subr.mxu0 0.0
  %200 = vmatpush1.msra.mxu0 0.0
  %201 = vmatprep.subr.mxu0 0.0
  %202 = vmatpush1.msra.mxu0 0.0
  %203 = vmatprep.subr.mxu0 0.0
  %204 = vmatpush1.msra.mxu0 0.0
  %205 = vmatprep.subr.mxu0 0.0
  %206 = vmatpush1.msra.mxu0 0.0
  %207 = vmatprep.subr.mxu0 0.0
  %208 = vmatpush1.msra.mxu0 0.0
  %209 = vmatprep.subr.mxu0 0.0
  %210 = vmatpush1.msra.mxu0 0.0
  %211 = vmatprep.mubr.f32.mxu0 0.0
  %212 = vmatmul.mubr.f32.gmra.mrb[0].mxu0 %v142
  %v213 = vpop.f32.mrb[0].mxu0
  %v214 = vadd.f32 %v139, %v213
  %v215 = vpop.f32.mrb[0].mxu0
  %216 = vmatprep.mubr.f32.mxu0 0.0
  %217 = vmatmul.mubr.f32.gmra.mrb[0].mxu0 %v145
  %v218 = vpop.f32.mrb[0].mxu0
  %v219 = vadd.f32 %v140, %v218
  %v220 = vpop.f32.mrb[0].mxu0
  %221 = vdwg.mxu0
  %v222 = vld [vmem:[%s4] sm:$0x1]
  %v224 = vlaneseq
  %v225 = vshrl.u32 %v224, 7
  %v226 = vsub.s32 0, %v225
  %v227 = vrot.slane %v222, %v226
  %v229 = vadd.f32 %v214, %v227
  %v230 = vadd.f32 %v219, %v227
  %231 = vst.msk [vmem:[%s5] sm:$0xff] %vm24, %v229
  %232 = vst.msk [vmem:[%s5 + $0x8] sm:$0xff] %vm24, %v230
  // Predicated region
  $region22: #{tpu_custom_call.1} parent=0 // pred_check
    _
  $region23: #{tpu_custom_call.1} parent=0 // pred_check_branch
    %234 = sbr.rel (0) target = $region25
  $region24: #{tpu_custom_call.1} parent=0 // pred_region
    _
  $region25: #{tpu_custom_call.1} parent=0 // pred_fallthru
    _
  // Predicated region
  $region26: #{tpu_custom_call.1} parent=0 // pred_check
    _
  $region27: #{tpu_custom_call.1} parent=0 // pred_check_branch
    %236 = sbr.rel (0) target = $region29
  $region28: #{tpu_custom_call.1} parent=0 // pred_region
    _
  $region29: #{tpu_custom_call.1} parent=0 // pred_fallthru
    _

</llo_original>
